<compile_context>
chip_gen: v7x
topology: tpu7x:2x2x1
jax: 0.10.0
libtpu: 0.0.40
codegen_flags: <defaults>
</compile_context>

<pallas_src>
import jax
import jax.numpy as jnp
from jax.experimental import pallas as pl
from jax.experimental.pallas import tpu as pltpu


def _round_up(x, m):
    return ((x + m - 1) // m) * m


def _pick_tile(default, n_pad):
    """Largest multiple of 128 that is <= default and divides n_pad."""
    t = min(default, n_pad)
    while n_pad % t:
        t -= 128
    return t


def sage_mlc_forward(x, edge_index, params, *, tm=512, tk=1024):
    """x: (N, F) float32; edge_index: (2, E) int32 [row0 = src, row1 = dst]."""
    n, f = x.shape
    wl, wr, b1, wfc, bfc = (params["w_l"], params["w_r"], params["b1"],
                            params["w_fc"], params["b_fc"])
    hid = wl.shape[1]
    ncls = wfc.shape[1]

    f_pad = _round_up(f, 128)
    h_pad = _round_up(hid, 128)
    c_pad = _round_up(ncls, 128)

    # Clamp tiles to the problem so tiny graphs aren't padded to huge matmuls.
    n_pad = _round_up(n, 128)
    tm = _pick_tile(tm, n_pad)
    tk = _pick_tile(tk, n_pad)

    src = edge_index[0].astype(jnp.int32)
    dst = edge_index[1].astype(jnp.int32)

    # Degree via E-scale segment sum (no N^2 reduce); raw edge-count adjacency
    # scatter-added directly into bf16 (counts <= 256 are exact in bf16).
    deg = jnp.zeros((n_pad,), jnp.float32).at[dst].add(1.0)
    deg_inv = jnp.where(deg > 0.0, 1.0 / jnp.maximum(deg, 1.0),
                        0.0).reshape(n_pad, 1)
    adj_bf16 = jnp.zeros((n_pad, n_pad), jnp.bfloat16).at[dst, src].add(
        jnp.ones(src.shape, jnp.bfloat16))

    x_pad = jnp.zeros((n_pad, f_pad), jnp.bfloat16).at[:n, :f].set(
        x.astype(jnp.bfloat16))

    # Lane-padded weights: bf16 for the MXU, biases stay f32.
    wl_p = jnp.zeros((f_pad, h_pad), jnp.bfloat16).at[:f, :hid].set(
        wl.astype(jnp.bfloat16))
    wr_p = jnp.zeros((f_pad, h_pad), jnp.bfloat16).at[:f, :hid].set(
        wr.astype(jnp.bfloat16))
    b1_p = jnp.zeros((1, h_pad), jnp.float32).at[:, :hid].set(b1.reshape(1, -1))
    wfc_p = jnp.zeros((h_pad, c_pad), jnp.bfloat16).at[:hid, :ncls].set(
        wfc.astype(jnp.bfloat16))
    bfc_p = jnp.zeros((1, c_pad), jnp.float32).at[:, :ncls].set(
        bfc.reshape(1, -1))

    grid = (n_pad // tm, n_pad // tk)

    def _kernel(a_ref, x_ref, dinv_ref, wl_ref, wr_ref, b1_ref, wfc_ref,
                bfc_ref, o_ref, acc_ref):
        i = pl.program_id(0)
        k = pl.program_id(1)

        @pl.when(k == 0)
        def _init():
            acc_ref[...] = jnp.zeros_like(acc_ref)

        # Aggregation partial sum: (TM, TK) bf16 @ (TK, F_pad) bf16 -> f32 acc.
        # X is VMEM-resident; slice its k-tile in-kernel (no HBM re-stream).
        xk = x_ref[pl.ds(pl.multiple_of(k * tk, 128), tk), :]
        acc_ref[...] += jnp.dot(a_ref[...], xk,
                                preferred_element_type=jnp.float32)

        @pl.when(k == pl.num_programs(1) - 1)
        def _epilogue():
            # mean = (sum of neighbor rows) * 1/deg (0 for isolated/padded rows)
            agg = acc_ref[...] * dinv_ref[...]
            xi = x_ref[pl.ds(pl.multiple_of(i * tm, 128), tm), :]
            # Split SAGE projection: agg @ W_l + x @ W_r (both bf16 MXU passes,
            # f32 accumulation), no (TM, 2F) f32 concat temporary.
            h = (jnp.dot(agg.astype(jnp.bfloat16), wl_ref[...],
                         preferred_element_type=jnp.float32)
                 + jnp.dot(xi, wr_ref[...],
                           preferred_element_type=jnp.float32)
                 + b1_ref[...])
            h = jnp.maximum(h, 0.0)  # ReLU
            o_ref[...] = (
                jnp.dot(h.astype(jnp.bfloat16), wfc_ref[...],
                        preferred_element_type=jnp.float32)
                + bfc_ref[...]
            )

    flops = (2 * n_pad * n_pad * f_pad            # aggregation matmul
             + 2 * 2 * n_pad * f_pad * h_pad      # two SAGE projection matmuls
             + 2 * n_pad * h_pad * c_pad)         # final Linear
    bytes_accessed = (adj_bf16.size * 2           # A streamed exactly once
                      + x_pad.size * 2            # X resident: fetched once
                      + deg_inv.size * 4
                      + (wl_p.size + wr_p.size + wfc_p.size) * 2
                      + (b1_p.size + bfc_p.size) * 4
                      + n_pad * c_pad * 4)        # output

    # VMEM budget (double buffers on streamed/constant inputs + scratch).
    vmem_need = (2 * tm * tk * 2                  # A tiles, bf16
                 + 2 * n_pad * f_pad * 2          # resident X
                 + 2 * tm * 4                     # deg_inv tile
                 + 2 * (2 * f_pad * h_pad * 2 + h_pad * c_pad * 2
                        + h_pad * 4 + c_pad * 4)  # weights / biases
                 + 2 * tm * c_pad * 4             # output tiles
                 + tm * f_pad * 4)                # f32 accumulator scratch
    vmem_limit = int(min(max(vmem_need + (2 << 20), 32 << 20), 64 << 20))

    out = pl.pallas_call(
        _kernel,
        out_shape=jax.ShapeDtypeStruct((n_pad, c_pad), jnp.float32),
        grid_spec=pltpu.PrefetchScalarGridSpec(
            num_scalar_prefetch=0,
            grid=grid,
            in_specs=[
                pl.BlockSpec((tm, tk), lambda i, k: (i, k)),          # A counts
                pl.BlockSpec((n_pad, f_pad), lambda i, k: (0, 0)),    # X (resident)
                pl.BlockSpec((tm, 1), lambda i, k: (i, 0)),           # 1/deg
                pl.BlockSpec((f_pad, h_pad), lambda i, k: (0, 0)),    # W_l
                pl.BlockSpec((f_pad, h_pad), lambda i, k: (0, 0)),    # W_r
                pl.BlockSpec((1, h_pad), lambda i, k: (0, 0)),        # b1
                pl.BlockSpec((h_pad, c_pad), lambda i, k: (0, 0)),    # W_fc
                pl.BlockSpec((1, c_pad), lambda i, k: (0, 0)),        # b_fc
            ],
            out_specs=pl.BlockSpec((tm, c_pad), lambda i, k: (i, 0)),
            scratch_shapes=[pltpu.VMEM((tm, f_pad), jnp.float32)],
        ),
        compiler_params=pltpu.CompilerParams(
            dimension_semantics=("parallel", "arbitrary"),
            vmem_limit_bytes=vmem_limit),
        cost_estimate=pl.CostEstimate(flops=flops, transcendentals=0,
                                      bytes_accessed=bytes_accessed),
    )(adj_bf16, x_pad, deg_inv, wl_p, wr_p, b1_p, wfc_p, bfc_p)

    return out[:n, :ncls]


def init_params(key, num_features, num_classes, hidden_channel=16):
    k1, k2, k3 = jax.random.split(key, 3)
    scale1 = 1.0 / jnp.sqrt(num_features)
    scale2 = 1.0 / jnp.sqrt(hidden_channel)
    return {
        # stored transposed relative to torch (in, out) so kernel does x @ W
        "w_l": jax.random.uniform(k1, (num_features, hidden_channel),
                                  jnp.float32, -scale1, scale1),
        "w_r": jax.random.uniform(k2, (num_features, hidden_channel),
                                  jnp.float32, -scale1, scale1),
        "b1": jnp.zeros((1, hidden_channel), jnp.float32),
        "w_fc": jax.random.uniform(k3, (hidden_channel, num_classes),
                                   jnp.float32, -scale2, scale2),
        "b_fc": jnp.zeros((1, num_classes), jnp.float32),
    }


if __name__ == "__main__":
    key = jax.random.PRNGKey(0)
    k_x, k_e, k_p = jax.random.split(key, 3)

    num_nodes = 16
    num_features = 8
    hidden_channel = 16
    num_classes = 4
    num_edges = 32

    x = jax.random.normal(k_x, (num_nodes, num_features), jnp.float32)
    edge_index = jax.random.randint(k_e, (2, num_edges), 0, num_nodes, jnp.int32)

    params = init_params(k_p, num_features, num_classes, hidden_channel)

    out = sage_mlc_forward(x, edge_index, params)
    jax.block_until_ready(out)
    assert out.shape == (num_nodes, num_classes)

    # Sanity check vs. plain-JAX reference mirroring the kernel's numerics
    # (x / agg / h / weights quantized to bf16 for the MXU streams; f32 accum).
    hp = jax.lax.Precision.HIGHEST
    q = lambda a: a.astype(jnp.bfloat16).astype(jnp.float32)
    xq = q(x)
    adj = jnp.zeros((num_nodes, num_nodes), jnp.float32).at[
        edge_index[1], edge_index[0]].add(1.0)
    deg = adj.sum(axis=1, keepdims=True)
    deg_inv = jnp.where(deg > 0, 1.0 / jnp.maximum(deg, 1.0), 0.0)
    agg = jnp.dot(adj, xq, precision=hp) * deg_inv
    h_ref = (jnp.dot(q(agg), q(params["w_l"]), precision=hp)
             + jnp.dot(xq, q(params["w_r"]), precision=hp) + params["b1"])
    h_ref = jnp.maximum(h_ref, 0.0)
    ref = jnp.dot(q(h_ref), q(params["w_fc"]), precision=hp) + params["b_fc"]

    assert jnp.allclose(out, ref, atol=1e-2, rtol=1e-2), (
        "mismatch vs reference: max abs err "
        f"{jnp.max(jnp.abs(out - ref))}")

    print("KERNEL_OK")
</pallas_src>

<mosaic_0001>
module attributes {stable_mosaic.version = 11 : i64} {
  func.func @_kernel(%arg0: i32, %arg1: i32, %arg2: memref<128x128xbf16, #tpu.memory_space<vmem>>, %arg3: memref<128x128xbf16, #tpu.memory_space<vmem>>, %arg4: memref<128x1xf32, #tpu.memory_space<vmem>>, %arg5: memref<128x128xbf16, #tpu.memory_space<vmem>>, %arg6: memref<128x128xbf16, #tpu.memory_space<vmem>>, %arg7: memref<1x128xf32, #tpu.memory_space<vmem>>, %arg8: memref<128x128xbf16, #tpu.memory_space<vmem>>, %arg9: memref<1x128xf32, #tpu.memory_space<vmem>>, %arg10: memref<128x128xf32, #tpu.memory_space<vmem>>, %arg11: memref<128x128xf32, #tpu.memory_space<vmem>>) attributes {dimension_semantics = [#tpu.dimension_semantics<parallel>, #tpu.dimension_semantics<arbitrary>], iteration_bounds = array<i64: 1, 1>, scalar_prefetch = 0 : i64, scratch_operands = 1 : i64, tpu.core_type = #tpu.core_type<tc>, window_params = [{transform_indices = @transform_0, window_bounds = array<i64: 128, 128>}, {pipeline_mode = #tpu.pipeline_mode<synchronous>, transform_indices = @transform_1, window_bounds = array<i64: 128, 128>}, {transform_indices = @transform_2, window_bounds = array<i64: 128, 1>}, {pipeline_mode = #tpu.pipeline_mode<synchronous>, transform_indices = @transform_3, window_bounds = array<i64: 128, 128>}, {pipeline_mode = #tpu.pipeline_mode<synchronous>, transform_indices = @transform_4, window_bounds = array<i64: 128, 128>}, {pipeline_mode = #tpu.pipeline_mode<synchronous>, transform_indices = @transform_5, window_bounds = array<i64: 1, 128>}, {pipeline_mode = #tpu.pipeline_mode<synchronous>, transform_indices = @transform_6, window_bounds = array<i64: 128, 128>}, {pipeline_mode = #tpu.pipeline_mode<synchronous>, transform_indices = @transform_7, window_bounds = array<i64: 1, 128>}, {transform_indices = @transform_8, window_bounds = array<i64: 128, 128>}]} {
    %c0_i32 = arith.constant 0 : i32
    %0 = arith.cmpi eq, %arg1, %c0_i32 : i32
    %1 = arith.extui %0 : i1 to i32
    %c0_i32_0 = arith.constant 0 : i32
    %2 = arith.cmpi ne, %1, %c0_i32_0 : i32
    scf.if %2 {
      %cst_9 = arith.constant 0.000000e+00 : f32
      %15 = vector.broadcast %cst_9 : f32 to vector<128x128xf32>
      %c0_10 = arith.constant 0 : index
      %c0_11 = arith.constant 0 : index
      %16 = vector.load %arg11[%c0_10, %c0_11] : memref<128x128xf32, #tpu.memory_space<vmem>>, vector<128x128xf32>
      tpu.vector_store %arg11[%c0_10, %c0_11], %15 {strides = array<i32>} : memref<128x128xf32, #tpu.memory_space<vmem>>, vector<128x128xf32>,
    } else {
    }
    %c128_i32 = arith.constant 128 : i32
    %3 = arith.muli %arg1, %c128_i32 : i32
    %4 = tpu.assume_multiple %3, 128 : i32
    %5 = arith.index_cast %4 : i32 to index
    %c0 = arith.constant 0 : index
    %6 = vector.load %arg3[%5, %c0] : memref<128x128xbf16, #tpu.memory_space<vmem>>, vector<128x128xbf16>
    %c0_1 = arith.constant 0 : index
    %c0_2 = arith.constant 0 : index
    %7 = vector.load %arg11[%c0_1, %c0_2] : memref<128x128xf32, #tpu.memory_space<vmem>>, vector<128x128xf32>
    %c0_3 = arith.constant 0 : index
    %c0_4 = arith.constant 0 : index
    %8 = vector.load %arg2[%c0_3, %c0_4] : memref<128x128xbf16, #tpu.memory_space<vmem>>, vector<128x128xbf16>
    %cst = arith.constant dense<0.000000e+00> : vector<128x128xf32>
    %9 = tpu.matmul %8, %6, %cst {dimension_numbers = #tpu.dot_dimension_numbers<[1], [0], [0], [1], [0, 0, 1, 1], [], []>} : vector<128x128xbf16>, vector<128x128xbf16>, vector<128x128xf32> -> vector<128x128xf32>
    %10 = arith.addf %7, %9 : vector<128x128xf32>
    %c0_5 = arith.constant 0 : index
    %c0_6 = arith.constant 0 : index
    %11 = vector.load %arg11[%c0_5, %c0_6] : memref<128x128xf32, #tpu.memory_space<vmem>>, vector<128x128xf32>
    tpu.vector_store %arg11[%c0_5, %c0_6], %10 {strides = array<i32>} : memref<128x128xf32, #tpu.memory_space<vmem>>, vector<128x128xf32>,
    %c0_i32_7 = arith.constant 0 : i32
    %12 = arith.cmpi eq, %arg1, %c0_i32_7 : i32
    %13 = arith.extui %12 : i1 to i32
    %c0_i32_8 = arith.constant 0 : i32
    %14 = arith.cmpi ne, %13, %c0_i32_8 : i32
    scf.if %14 {
      %c0_9 = arith.constant 0 : index
      %c0_10 = arith.constant 0 : index
      %15 = vector.load %arg11[%c0_9, %c0_10] : memref<128x128xf32, #tpu.memory_space<vmem>>, vector<128x128xf32>
      %c0_11 = arith.constant 0 : index
      %c0_12 = arith.constant 0 : index
      %16 = vector.load %arg4[%c0_11, %c0_12] : memref<128x1xf32, #tpu.memory_space<vmem>>, vector<128x1xf32>
      %17 = vector.broadcast %16 : vector<128x1xf32> to vector<128x128xf32>
      %18 = arith.mulf %15, %17 : vector<128x128xf32>
      %c128_i32_13 = arith.constant 128 : i32
      %19 = arith.muli %arg0, %c128_i32_13 : i32
      %20 = tpu.assume_multiple %19, 128 : i32
      %21 = arith.index_cast %20 : i32 to index
      %c0_14 = arith.constant 0 : index
      %22 = vector.load %arg3[%21, %c0_14] : memref<128x128xbf16, #tpu.memory_space<vmem>>, vector<128x128xbf16>
      %23 = arith.truncf %18 : vector<128x128xf32> to vector<128x128xbf16>
      %c0_15 = arith.constant 0 : index
      %c0_16 = arith.constant 0 : index
      %24 = vector.load %arg5[%c0_15, %c0_16] : memref<128x128xbf16, #tpu.memory_space<vmem>>, vector<128x128xbf16>
      %cst_17 = arith.constant dense<0.000000e+00> : vector<128x128xf32>
      %25 = tpu.matmul %23, %24, %cst_17 {dimension_numbers = #tpu.dot_dimension_numbers<[1], [0], [0], [1], [0, 0, 1, 1], [], []>} : vector<128x128xbf16>, vector<128x128xbf16>, vector<128x128xf32> -> vector<128x128xf32>
      %c0_18 = arith.constant 0 : index
      %c0_19 = arith.constant 0 : index
      %26 = vector.load %arg6[%c0_18, %c0_19] : memref<128x128xbf16, #tpu.memory_space<vmem>>, vector<128x128xbf16>
      %cst_20 = arith.constant dense<0.000000e+00> : vector<128x128xf32>
      %27 = tpu.matmul %22, %26, %cst_20 {dimension_numbers = #tpu.dot_dimension_numbers<[1], [0], [0], [1], [0, 0, 1, 1], [], []>} : vector<128x128xbf16>, vector<128x128xbf16>, vector<128x128xf32> -> vector<128x128xf32>
      %28 = arith.addf %25, %27 : vector<128x128xf32>
      %c0_21 = arith.constant 0 : index
      %c0_22 = arith.constant 0 : index
      %29 = vector.load %arg7[%c0_21, %c0_22] : memref<1x128xf32, #tpu.memory_space<vmem>>, vector<1x128xf32>
      %30 = vector.broadcast %29 : vector<1x128xf32> to vector<128x128xf32>
      %31 = arith.addf %28, %30 : vector<128x128xf32>
      %cst_23 = arith.constant 0.000000e+00 : f32
      %32 = vector.broadcast %cst_23 : f32 to vector<128x128xf32>
      %33 = arith.maximumf %31, %32 : vector<128x128xf32>
      %34 = arith.truncf %33 : vector<128x128xf32> to vector<128x128xbf16>
      %c0_24 = arith.constant 0 : index
      %c0_25 = arith.constant 0 : index
      %35 = vector.load %arg8[%c0_24, %c0_25] : memref<128x128xbf16, #tpu.memory_space<vmem>>, vector<128x128xbf16>
      %cst_26 = arith.constant dense<0.000000e+00> : vector<128x128xf32>
      %36 = tpu.matmul %34, %35, %cst_26 {dimension_numbers = #tpu.dot_dimension_numbers<[1], [0], [0], [1], [0, 0, 1, 1], [], []>} : vector<128x128xbf16>, vector<128x128xbf16>, vector<128x128xf32> -> vector<128x128xf32>
      %c0_27 = arith.constant 0 : index
      %c0_28 = arith.constant 0 : index
      %37 = vector.load %arg9[%c0_27, %c0_28] : memref<1x128xf32, #tpu.memory_space<vmem>>, vector<1x128xf32>
      %38 = vector.broadcast %37 : vector<1x128xf32> to vector<128x128xf32>
      %39 = arith.addf %36, %38 : vector<128x128xf32>
      %c0_29 = arith.constant 0 : index
      %c0_30 = arith.constant 0 : index
      %40 = vector.load %arg10[%c0_29, %c0_30] : memref<128x128xf32, #tpu.memory_space<vmem>>, vector<128x128xf32>
      tpu.vector_store %arg10[%c0_29, %c0_30], %39 {strides = array<i32>} : memref<128x128xf32, #tpu.memory_space<vmem>>, vector<128x128xf32>,
    } else {
    }
    return
  }
  func.func @transform_0(%arg0: i32, %arg1: i32) -> (i32, i32) {
    %c0_i32 = arith.constant 0 : i32
    return %arg0, %arg1 : i32, i32
  }
  func.func @transform_1(%arg0: i32, %arg1: i32) -> (i32, i32) {
    %c0_i32 = arith.constant 0 : i32
    %c0_i32_0 = arith.constant 0 : i32
    %c0_i32_1 = arith.constant 0 : i32
    return %c0_i32, %c0_i32_0 : i32, i32
  }
  func.func @transform_2(%arg0: i32, %arg1: i32) -> (i32, i32) {
    %c0_i32 = arith.constant 0 : i32
    %c0_i32_0 = arith.constant 0 : i32
    return %arg0, %c0_i32 : i32, i32
  }
  func.func @transform_3(%arg0: i32, %arg1: i32) -> (i32, i32) {
    %c0_i32 = arith.constant 0 : i32
    %c0_i32_0 = arith.constant 0 : i32
    %c0_i32_1 = arith.constant 0 : i32
    return %c0_i32, %c0_i32_0 : i32, i32
  }
  func.func @transform_4(%arg0: i32, %arg1: i32) -> (i32, i32) {
    %c0_i32 = arith.constant 0 : i32
    %c0_i32_0 = arith.constant 0 : i32
    %c0_i32_1 = arith.constant 0 : i32
    return %c0_i32, %c0_i32_0 : i32, i32
  }
  func.func @transform_5(%arg0: i32, %arg1: i32) -> (i32, i32) {
    %c0_i32 = arith.constant 0 : i32
    %c0_i32_0 = arith.constant 0 : i32
    %c0_i32_1 = arith.constant 0 : i32
    return %c0_i32, %c0_i32_0 : i32, i32
  }
  func.func @transform_6(%arg0: i32, %arg1: i32) -> (i32, i32) {
    %c0_i32 = arith.constant 0 : i32
    %c0_i32_0 = arith.constant 0 : i32
    %c0_i32_1 = arith.constant 0 : i32
    return %c0_i32, %c0_i32_0 : i32, i32
  }
  func.func @transform_7(%arg0: i32, %arg1: i32) -> (i32, i32) {
    %c0_i32 = arith.constant 0 : i32
    %c0_i32_0 = arith.constant 0 : i32
    %c0_i32_1 = arith.constant 0 : i32
    return %c0_i32, %c0_i32_0 : i32, i32
  }
  func.func @transform_8(%arg0: i32, %arg1: i32) -> (i32, i32) {
    %c0_i32 = arith.constant 0 : i32
    %c0_i32_0 = arith.constant 0 : i32
    return %arg0, %c0_i32 : i32, i32
  }
}

</mosaic_0001>

<llo_original>
// kernel: tpu_custom_call.1
$region0: #{tpu_custom_call.1}
  #allocation0 [shape = 'u32[]', space=smem, size = 0x4, offset = 0x4, fixed_abs, tag = 'smem constant byte address 0x4 - core index']
  #allocation1 [shape = 'u32[144,128]{1,0:T(1,128)}', space=vmem, size = 0x12000, scoped, tag = 'internal scratch']
  #allocation2 [shape = 'f32[128,128]{1,0:T(8,128)}', space=vmem, size = 0x10000, scoped, tag = 'scratch operand']
  %s0 = inlined_call_operand.vmem [shape: bf16[128,128], index: 0, kind: input, shape index: {}]
  %s1 = inlined_call_operand.vmem [shape: bf16[128,128], index: 1, kind: input, shape index: {}]
  %s2 = inlined_call_operand.vmem [shape: f32[128,1], index: 2, kind: input, shape index: {}]
  %s3 = inlined_call_operand.hbm [shape: bf16[128,128], index: 3, kind: input, shape index: {}]
  %s4 = inlined_call_operand.hbm [shape: bf16[128,128], index: 4, kind: input, shape index: {}]
  %s5 = inlined_call_operand.vmem [shape: f32[1,128], index: 5, kind: input, shape index: {}]
  %s6 = inlined_call_operand.hbm [shape: bf16[128,128], index: 6, kind: input, shape index: {}]
  %s7 = inlined_call_operand.vmem [shape: f32[1,128], index: 7, kind: input, shape index: {}]
  %s8 = inlined_call_operand.hbm [shape: f32[128,128], index: 8, kind: output, shape index: {}]
  %s9 = sld [smem:[#allocation0]]
  $region62: #{tpu_custom_call.1} parent=0
    _
  %s11 = ssub.s32 1, %s9
  %s12 = scalar_select 0, %s11, %s9
  $region1: #{tpu_custom_call.1} parent=0
    #allocation3 [shape = 'u8[32768]{0}', space=vmem, size = 0x8000, scoped, tag = 'input window, operand 3, single buffered']
    #allocation4 [shape = 's32[1]{0}', space=sflag, size = 0x4, scoped, tag = 'scoped memory for tpu_custom_call.1']
    #allocation5 [shape = 's32[1]{0}', space=sflag, size = 0x4, scoped, tag = 'scoped memory for tpu_custom_call.1']
    #allocation6 [shape = 'u8[32768]{0}', space=vmem, size = 0x8000, scoped, tag = 'input window, operand 4, single buffered']
    #allocation7 [shape = 's32[1]{0}', space=sflag, size = 0x4, scoped, tag = 'scoped memory for tpu_custom_call.1']
    #allocation8 [shape = 'u8[32768]{0}', space=vmem, size = 0x8000, scoped, tag = 'input window, operand 6, single buffered']
    #allocation9 [shape = 'u8[65536]{0}', space=vmem, size = 0x10000, scoped, tag = 'output window, operand 0, single buffered']
    %13 = vsyncpa [#allocation4], 0
    %14 = vsyncpa [#allocation7], 0
    %15 = vsyncpa [#allocation5], 0
    // Predicated region
    $region2: #{tpu_custom_call.1} parent=1 // pred_check
      _
    $region3: #{tpu_custom_call.1} parent=1 // pred_check_branch
      %17 = sbr.rel (0) target = $region5
    $region4: #{tpu_custom_call.1} parent=1 // pred_region
      _
    $region5: #{tpu_custom_call.1} parent=1 // pred_fallthru
      _
    // Predicated region
    $region6: #{tpu_custom_call.1} parent=1 // pred_check
      _
    $region7: #{tpu_custom_call.1} parent=1 // pred_check_branch
      %19 = sbr.rel (0) target = $region9
    $region8: #{tpu_custom_call.1} parent=1 // pred_region
      _
    $region9: #{tpu_custom_call.1} parent=1 // pred_fallthru
      _
    // Predicated region
    $region10: #{tpu_custom_call.1} parent=1 // pred_check
      _
    $region11: #{tpu_custom_call.1} parent=1 // pred_check_branch
      %21 = sbr.rel (0) target = $region13
    $region12: #{tpu_custom_call.1} parent=1 // pred_region
      _
    $region13: #{tpu_custom_call.1} parent=1 // pred_fallthru
      _
    // Predicated region
    $region14: #{tpu_custom_call.1} parent=1 // pred_check
      _
    $region15: #{tpu_custom_call.1} parent=1 // pred_check_branch
      %23 = sbr.rel (0) target = $region17
    $region16: #{tpu_custom_call.1} parent=1 // pred_region
      %s25 = ssub.s32 1024, 1024
      %26 = vsyncadd [#allocation4], %s25
      %s27 = sshll.u32 [#allocation3], 4
      %s28 = int_to_ptr.vmem [resolvable:$true] %s27
      %33 = dma.hbm_to_vmem [thread:$0]  %s3, 1024, %s28, [#allocation4], 64, 64, 4
    $region17: #{tpu_custom_call.1} parent=1 // pred_fallthru
      _
    // Predicated region
    $region18: #{tpu_custom_call.1} parent=1 // pred_check
      _
    $region19: #{tpu_custom_call.1} parent=1 // pred_check_branch
      %35 = sbr.rel (0) target = $region21
    $region20: #{tpu_custom_call.1} parent=1 // pred_region
      %s37 = ssub.s32 1024, 1024
      %38 = vsyncadd [#allocation7], %s37
      %s39 = sshll.u32 [#allocation6], 4
      %s40 = int_to_ptr.vmem [resolvable:$true] %s39
      %45 = dma.hbm_to_vmem [thread:$0]  %s4, 1024, %s40, [#allocation7], 64, 64, 4
    $region21: #{tpu_custom_call.1} parent=1 // pred_fallthru
      _
    // Predicated region
    $region22: #{tpu_custom_call.1} parent=1 // pred_check
      _
    $region23: #{tpu_custom_call.1} parent=1 // pred_check_branch
      %47 = sbr.rel (0) target = $region25
    $region24: #{tpu_custom_call.1} parent=1 // pred_region
      _
    $region25: #{tpu_custom_call.1} parent=1 // pred_fallthru
      _
    // Predicated region
    $region26: #{tpu_custom_call.1} parent=1 // pred_check
      _
    $region27: #{tpu_custom_call.1} parent=1 // pred_check_branch
      %49 = sbr.rel (0) target = $region29
    $region28: #{tpu_custom_call.1} parent=1 // pred_region
      %s51 = ssub.s32 1024, 1024
      %52 = vsyncadd [#allocation7], %s51
      %s53 = sshll.u32 [#allocation8], 4
      %s54 = int_to_ptr.vmem [resolvable:$true] %s53
      %59 = dma.hbm_to_vmem [thread:$0]  %s6, 1024, %s54, [#allocation7], 64, 64, 4
    $region29: #{tpu_custom_call.1} parent=1 // pred_fallthru
      _
    // Predicated region
    $region30: #{tpu_custom_call.1} parent=1 // pred_check
      _
    $region31: #{tpu_custom_call.1} parent=1 // pred_check_branch
      %61 = sbr.rel (0) target = $region33
    $region32: #{tpu_custom_call.1} parent=1 // pred_region
      _
    $region33: #{tpu_custom_call.1} parent=1 // pred_fallthru
      _
    // Predicated region
    $region34: #{tpu_custom_call.1} parent=1 // pred_check
      _
    $region35: #{tpu_custom_call.1} parent=1 // pred_check_branch
      %63 = sbr.rel (0) target = $region37
    $region36: #{tpu_custom_call.1} parent=1 // pred_region
      %64 = dma.done [#allocation4], 1024
    $region37: #{tpu_custom_call.1} parent=1 // pred_fallthru
      _
    // Predicated region
    $region38: #{tpu_custom_call.1} parent=1 // pred_check
      _
    $region39: #{tpu_custom_call.1} parent=1 // pred_check_branch
      %66 = sbr.rel (0) target = $region41
    $region40: #{tpu_custom_call.1} parent=1 // pred_region
      %67 = dma.done [#allocation7], 1024
    $region41: #{tpu_custom_call.1} parent=1 // pred_fallthru
      _
    // Predicated region
    $region42: #{tpu_custom_call.1} parent=1 // pred_check
      _
    $region43: #{tpu_custom_call.1} parent=1 // pred_check_branch
      %69 = sbr.rel (0) target = $region45
    $region44: #{tpu_custom_call.1} parent=1 // pred_region
      %70 = dma.done [#allocation7], 1024
    $region45: #{tpu_custom_call.1} parent=1 // pred_fallthru
      _
    %p72 = scmp.eq.s32.totalorder 0, 0
    // Predicated region
    $region46: #{tpu_custom_call.1} parent=1 // pred_check
      %p73 = pneg %p72
    $region47: #{tpu_custom_call.1} parent=1 // pred_check_branch
      %75 = sbr.rel (%p73) target = $region49
    $region48: #{tpu_custom_call.1} parent=1 // pred_region
      %76 = vst [vmem:[#allocation2] sm:$0xff] 0.0
      %77 = vst [vmem:[#allocation2 + $0x8] sm:$0xff] 0.0
      %78 = vst [vmem:[#allocation2 + $0x10] sm:$0xff] 0.0
      %79 = vst [vmem:[#allocation2 + $0x18] sm:$0xff] 0.0
      %80 = vst [vmem:[#allocation2 + $0x20] sm:$0xff] 0.0
      %81 = vst [vmem:[#allocation2 + $0x28] sm:$0xff] 0.0
      %82 = vst [vmem:[#allocation2 + $0x30] sm:$0xff] 0.0
      %83 = vst [vmem:[#allocation2 + $0x38] sm:$0xff] 0.0
      %84 = vst [vmem:[#allocation2 + $0x40] sm:$0xff] 0.0
      %85 = vst [vmem:[#allocation2 + $0x48] sm:$0xff] 0.0
      %86 = vst [vmem:[#allocation2 + $0x50] sm:$0xff] 0.0
      %87 = vst [vmem:[#allocation2 + $0x58] sm:$0xff] 0.0
      %88 = vst [vmem:[#allocation2 + $0x60] sm:$0xff] 0.0
      %89 = vst [vmem:[#allocation2 + $0x68] sm:$0xff] 0.0
      %90 = vst [vmem:[#allocation2 + $0x70] sm:$0xff] 0.0
      %91 = vst [vmem:[#allocation2 + $0x78] sm:$0xff] 0.0
    $region49: #{tpu_custom_call.1} parent=1 // pred_fallthru
      _
    %s92 = smul.u32 0, 128
    %s93 = sshra.s32 %s92, 3
    %s94 = sand.u32 %s92, 7
    %s95 = smul.addr %s93, 4
    %s96 = scalar_lea.vmem %s1, %s95
    %v97 = vld [vmem:[%s96] sm:$0xf]
    %v98 = vld [vmem:[%s96 + $0x4] sm:$0xf]
    %v99 = vld [vmem:[%s96 + $0x8] sm:$0xf]
    %v100 = vld [vmem:[%s96 + $0xc] sm:$0xf]
    %v101 = vld [vmem:[%s96 + $0x10] sm:$0xf]
    %v102 = vld [vmem:[%s96 + $0x14] sm:$0xf]
    %v103 = vld [vmem:[%s96 + $0x18] sm:$0xf]
    %v104 = vld [vmem:[%s96 + $0x1c] sm:$0xf]
    %v105 = vld [vmem:[%s96 + $0x20] sm:$0xf]
    %v106 = vld [vmem:[%s96 + $0x24] sm:$0xf]
    %v107 = vld [vmem:[%s96 + $0x28] sm:$0xf]
    %v108 = vld [vmem:[%s96 + $0x2c] sm:$0xf]
    %v109 = vld [vmem:[%s96 + $0x30] sm:$0xf]
    %v110 = vld [vmem:[%s96 + $0x34] sm:$0xf]
    %v111 = vld [vmem:[%s96 + $0x38] sm:$0xf]
    %v112 = vld [vmem:[%s96 + $0x3c] sm:$0xf]
    %v113 = vld [vmem:[#allocation2] sm:$0xff]
    %v114 = vld [vmem:[#allocation2 + $0x8] sm:$0xff]
    %v115 = vld [vmem:[#allocation2 + $0x10] sm:$0xff]
    %v116 = vld [vmem:[#allocation2 + $0x18] sm:$0xff]
    %v117 = vld [vmem:[#allocation2 + $0x20] sm:$0xff]
    %v118 = vld [vmem:[#allocation2 + $0x28] sm:$0xff]
    %v119 = vld [vmem:[#allocation2 + $0x30] sm:$0xff]
    %v120 = vld [vmem:[#allocation2 + $0x38] sm:$0xff]
    %v121 = vld [vmem:[#allocation2 + $0x40] sm:$0xff]
    %v122 = vld [vmem:[#allocation2 + $0x48] sm:$0xff]
    %v123 = vld [vmem:[#allocation2 + $0x50] sm:$0xff]
    %v124 = vld [vmem:[#allocation2 + $0x58] sm:$0xff]
    %v125 = vld [vmem:[#allocation2 + $0x60] sm:$0xff]
    %v126 = vld [vmem:[#allocation2 + $0x68] sm:$0xff]
    %v127 = vld [vmem:[#allocation2 + $0x70] sm:$0xff]
    %v128 = vld [vmem:[#allocation2 + $0x78] sm:$0xff]
    %v129 = vld [vmem:[%s0] sm:$0xf]
    %v130 = vld [vmem:[%s0 + $0x4] sm:$0xf]
    %v131 = vld [vmem:[%s0 + $0x8] sm:$0xf]
    %v132 = vld [vmem:[%s0 + $0xc] sm:$0xf]
    %v133 = vld [vmem:[%s0 + $0x10] sm:$0xf]
    %v134 = vld [vmem:[%s0 + $0x14] sm:$0xf]
    %v135 = vld [vmem:[%s0 + $0x18] sm:$0xf]
    %v136 = vld [vmem:[%s0 + $0x1c] sm:$0xf]
    %v137 = vld [vmem:[%s0 + $0x20] sm:$0xf]
    %v138 = vld [vmem:[%s0 + $0x24] sm:$0xf]
    %v139 = vld [vmem:[%s0 + $0x28] sm:$0xf]
    %v140 = vld [vmem:[%s0 + $0x2c] sm:$0xf]
    %v141 = vld [vmem:[%s0 + $0x30] sm:$0xf]
    %v142 = vld [vmem:[%s0 + $0x34] sm:$0xf]
    %v143 = vld [vmem:[%s0 + $0x38] sm:$0xf]
    %v144 = vld [vmem:[%s0 + $0x3c] sm:$0xf]
    %v161 = vunpack.c.l.b16 %v129
    %v162 = vunpack.c.l.b16 %v130
    %v163 = vunpack.c.l.b16 %v131
    %v164 = vunpack.c.l.b16 %v132
    %v165 = vunpack.c.l.b16 %v133
    %v166 = vunpack.c.l.b16 %v134
    %v167 = vunpack.c.l.b16 %v135
    %v168 = vunpack.c.l.b16 %v136
    %v169 = vunpack.c.l.b16 %v137
    %v170 = vunpack.c.l.b16 %v138
    %v171 = vunpack.c.l.b16 %v139
    %v172 = vunpack.c.l.b16 %v140
    %v173 = vunpack.c.l.b16 %v141
    %v174 = vunpack.c.l.b16 %v142
    %v175 = vunpack.c.l.b16 %v143
    %v176 = vunpack.c.l.b16 %v144
    %v177 = vpack.c.b16 %v162, %v161
    %v178 = vpack.c.b16 %v164, %v163
    %v179 = vpack.c.b16 %v166, %v165
    %v180 = vpack.c.b16 %v168, %v167
    %v181 = vpack.c.b16 %v170, %v169
    %v182 = vpack.c.b16 %v172, %v171
    %v183 = vpack.c.b16 %v174, %v173
    %v184 = vpack.c.b16 %v176, %v175
    %v209 = vunpack.c.l.b16 %v97
    %v210 = vunpack.c.l.b16 %v98
    %v211 = vunpack.c.l.b16 %v99
    %v212 = vunpack.c.l.b16 %v100
    %v213 = vunpack.c.l.b16 %v101
    %v214 = vunpack.c.l.b16 %v102
    %v215 = vunpack.c.l.b16 %v103
    %v216 = vunpack.c.l.b16 %v104
    %v217 = vunpack.c.l.b16 %v105
    %v218 = vunpack.c.l.b16 %v106
    %v219 = vunpack.c.l.b16 %v107
    %v220 = vunpack.c.l.b16 %v108
    %v221 = vunpack.c.l.b16 %v109
    %v222 = vunpack.c.l.b16 %v110
    %v223 = vunpack.c.l.b16 %v111
    %v224 = vunpack.c.l.b16 %v112
    %v225 = vpack.c.b16 %v210, %v209
    %v226 = vpack.c.b16 %v212, %v211
    %v227 = vpack.c.b16 %v214, %v213
    %v228 = vpack.c.b16 %v216, %v215
    %v229 = vpack.c.b16 %v218, %v217
    %v230 = vpack.c.b16 %v220, %v219
    %v231 = vpack.c.b16 %v222, %v221
    %v232 = vpack.c.b16 %v224, %v223
    %241 = vmatprep.subr.bf16.mxu0 0
    %242 = vmatpush1.bf16.msra.mxu0 %v225
    %243 = vmatprep.subr.bf16.mxu0 0
    %244 = vmatpush1.bf16.msra.mxu0 %v226
    %245 = vmatprep.subr.bf16.mxu0 0
    %246 = vmatpush1.bf16.msra.mxu0 %v227
    %247 = vmatprep.subr.bf16.mxu0 0
    %248 = vmatpush1.bf16.msra.mxu0 %v228
    %249 = vmatprep.subr.bf16.mxu0 0
    %250 = vmatpush1.bf16.msra.mxu0 %v229
    %251 = vmatprep.subr.bf16.mxu0 0
    %252 = vmatpush1.bf16.msra.mxu0 %v230
    %253 = vmatprep.subr.bf16.mxu0 0
    %254 = vmatpush1.bf16.msra.mxu0 %v231
    %255 = vmatprep.subr.bf16.mxu0 0
    %256 = vmatpush1.bf16.msra.mxu0 %v232
    %257 = vmatprep.subr.bf16.mxu0 0
    %258 = vmatpush1.bf16.msra.mxu0 0
    %259 = vmatprep.subr.bf16.mxu0 0
    %260 = vmatpush1.bf16.msra.mxu0 0
    %261 = vmatprep.subr.bf16.mxu0 0
    %262 = vmatpush1.bf16.msra.mxu0 0
    %263 = vmatprep.subr.bf16.mxu0 0
    %264 = vmatpush1.bf16.msra.mxu0 0
    %265 = vmatprep.subr.bf16.mxu0 0
    %266 = vmatpush1.bf16.msra.mxu0 0
    %267 = vmatprep.subr.bf16.mxu0 0
    %268 = vmatpush1.bf16.msra.mxu0 0
    %269 = vmatprep.subr.bf16.mxu0 0
    %270 = vmatpush1.bf16.msra.mxu0 0
    %271 = vmatprep.subr.bf16.mxu0 0
    %272 = vmatpush1.bf16.msra.mxu0 0
    %273 = vmatprep.mubr.bf16.mxu0 0
    %274 = vmatmul.mubr.bf16.gmra.mrb[0].mxu0 %v177
    %v275 = vpop.f32.mrb[0].mxu0
    %v276 = vadd.f32 0.0, %v275
    %v277 = vpop.f32.mrb[0].mxu0
    %v278 = vpop.f32.mrb[0].mxu0
    %v279 = vadd.f32 0.0, %v278
    %v280 = vpop.f32.mrb[0].mxu0
    %281 = vmatprep.mubr.bf16.mxu0 0
    %282 = vmatmul.mubr.bf16.gmra.mrb[0].mxu0 %v178
    %v283 = vpop.f32.mrb[0].mxu0
    %v284 = vadd.f32 0.0, %v283
    %v285 = vpop.f32.mrb[0].mxu0
    %v286 = vpop.f32.mrb[0].mxu0
    %v287 = vadd.f32 0.0, %v286
    %v288 = vpop.f32.mrb[0].mxu0
    %289 = vmatprep.mubr.bf16.mxu0 0
    %290 = vmatmul.mubr.bf16.gmra.mrb[0].mxu0 %v179
    %v291 = vpop.f32.mrb[0].mxu0
    %v292 = vadd.f32 0.0, %v291
    %v293 = vpop.f32.mrb[0].mxu0
    %v294 = vpop.f32.mrb[0].mxu0
    %v295 = vadd.f32 0.0, %v294
    %v296 = vpop.f32.mrb[0].mxu0
    %297 = vmatprep.mubr.bf16.mxu0 0
    %298 = vmatmul.mubr.bf16.gmra.mrb[0].mxu0 %v180
    %v299 = vpop.f32.mrb[0].mxu0
    %v300 = vadd.f32 0.0, %v299
    %v301 = vpop.f32.mrb[0].mxu0
    %v302 = vpop.f32.mrb[0].mxu0
    %v303 = vadd.f32 0.0, %v302
    %v304 = vpop.f32.mrb[0].mxu0
    %305 = vmatprep.mubr.bf16.mxu0 0
    %306 = vmatmul.mubr.bf16.gmra.mrb[0].mxu0 %v181
    %v307 = vpop.f32.mrb[0].mxu0
    %v308 = vadd.f32 0.0, %v307
    %v309 = vpop.f32.mrb[0].mxu0
    %v310 = vpop.f32.mrb[0].mxu0
    %v311 = vadd.f32 0.0, %v310
    %v312 = vpop.f32.mrb[0].mxu0
    %313 = vmatprep.mubr.bf16.mxu0 0
    %314 = vmatmul.mubr.bf16.gmra.mrb[0].mxu0 %v182
    %v315 = vpop.f32.mrb[0].mxu0
    %v316 = vadd.f32 0.0, %v315
    %v317 = vpop.f32.mrb[0].mxu0
    %v318 = vpop.f32.mrb[0].mxu0
    %v319 = vadd.f32 0.0, %v318
    %v320 = vpop.f32.mrb[0].mxu0
    %321 = vmatprep.mubr.bf16.mxu0 0
    %322 = vmatmul.mubr.bf16.gmra.mrb[0].mxu0 %v183
    %v323 = vpop.f32.mrb[0].mxu0
    %v324 = vadd.f32 0.0, %v323
    %v325 = vpop.f32.mrb[0].mxu0
    %v326 = vpop.f32.mrb[0].mxu0
    %v327 = vadd.f32 0.0, %v326
    %v328 = vpop.f32.mrb[0].mxu0
    %329 = vmatprep.mubr.bf16.mxu0 0
    %330 = vmatmul.mubr.bf16.gmra.mrb[0].mxu0 %v184
    %v331 = vpop.f32.mrb[0].mxu0
    %v332 = vadd.f32 0.0, %v331
    %v333 = vpop.f32.mrb[0].mxu0
    %v334 = vpop.f32.mrb[0].mxu0
    %v335 = vadd.f32 0.0, %v334
    %v336 = vpop.f32.mrb[0].mxu0
    %337 = vdwg.mxu0
    %v338 = vadd.f32 %v113, %v276
    %v339 = vadd.f32 %v114, %v279
    %v340 = vadd.f32 %v115, %v284
    %v341 = vadd.f32 %v116, %v287
    %v342 = vadd.f32 %v117, %v292
    %v343 = vadd.f32 %v118, %v295
    %v344 = vadd.f32 %v119, %v300
    %v345 = vadd.f32 %v120, %v303
    %v346 = vadd.f32 %v121, %v308
    %v347 = vadd.f32 %v122, %v311
    %v348 = vadd.f32 %v123, %v316
    %v349 = vadd.f32 %v124, %v319
    %v350 = vadd.f32 %v125, %v324
    %v351 = vadd.f32 %v126, %v327
    %v352 = vadd.f32 %v127, %v332
    %v353 = vadd.f32 %v128, %v335
    %354 = vst [vmem:[#allocation2] sm:$0xff] %v338
    %355 = vst [vmem:[#allocation2 + $0x8] sm:$0xff] %v339
    %356 = vst [vmem:[#allocation2 + $0x10] sm:$0xff] %v340
    %357 = vst [vmem:[#allocation2 + $0x18] sm:$0xff] %v341
    %358 = vst [vmem:[#allocation2 + $0x20] sm:$0xff] %v342
    %359 = vst [vmem:[#allocation2 + $0x28] sm:$0xff] %v343
    %360 = vst [vmem:[#allocation2 + $0x30] sm:$0xff] %v344
    %361 = vst [vmem:[#allocation2 + $0x38] sm:$0xff] %v345
    %362 = vst [vmem:[#allocation2 + $0x40] sm:$0xff] %v346
    %363 = vst [vmem:[#allocation2 + $0x48] sm:$0xff] %v347
    %364 = vst [vmem:[#allocation2 + $0x50] sm:$0xff] %v348
    %365 = vst [vmem:[#allocation2 + $0x58] sm:$0xff] %v349
    %366 = vst [vmem:[#allocation2 + $0x60] sm:$0xff] %v350
    %367 = vst [vmem:[#allocation2 + $0x68] sm:$0xff] %v351
    %368 = vst [vmem:[#allocation2 + $0x70] sm:$0xff] %v352
    %369 = vst [vmem:[#allocation2 + $0x78] sm:$0xff] %v353
    // Predicated region
    $region50: #{tpu_custom_call.1} parent=1 // pred_check
      %p370 = pneg %p72
    $region51: #{tpu_custom_call.1} parent=1 // pred_check_branch
      %372 = sbr.rel (%p370) target = $region53
    $region52: #{tpu_custom_call.1} parent=1 // pred_region
      %v373 = vld [vmem:[#allocation2] sm:$0xff]
      %v374 = vld [vmem:[#allocation2 + $0x8] sm:$0xff]
      %v375 = vld [vmem:[#allocation2 + $0x10] sm:$0xff]
      %v376 = vld [vmem:[#allocation2 + $0x18] sm:$0xff]
      %v377 = vld [vmem:[#allocation2 + $0x20] sm:$0xff]
      %v378 = vld [vmem:[#allocation2 + $0x28] sm:$0xff]
      %v379 = vld [vmem:[#allocation2 + $0x30] sm:$0xff]
      %v380 = vld [vmem:[#allocation2 + $0x38] sm:$0xff]
      %v381 = vld [vmem:[#allocation2 + $0x40] sm:$0xff]
      %v382 = vld [vmem:[#allocation2 + $0x48] sm:$0xff]
      %v383 = vld [vmem:[#allocation2 + $0x50] sm:$0xff]
      %v384 = vld [vmem:[#allocation2 + $0x58] sm:$0xff]
      %v385 = vld [vmem:[#allocation2 + $0x60] sm:$0xff]
      %v386 = vld [vmem:[#allocation2 + $0x68] sm:$0xff]
      %v387 = vld [vmem:[#allocation2 + $0x70] sm:$0xff]
      %v388 = vld [vmem:[#allocation2 + $0x78] sm:$0xff]
      %v389 = vld [vmem:[%s2] sm:$0xff]
      %v390 = vld [vmem:[%s2 + $0x8] sm:$0xff]
      %v391 = vld [vmem:[%s2 + $0x10] sm:$0xff]
      %v392 = vld [vmem:[%s2 + $0x18] sm:$0xff]
      %v393 = vld [vmem:[%s2 + $0x20] sm:$0xff]
      %v394 = vld [vmem:[%s2 + $0x28] sm:$0xff]
      %v395 = vld [vmem:[%s2 + $0x30] sm:$0xff]
      %v396 = vld [vmem:[%s2 + $0x38] sm:$0xff]
      %v397 = vld [vmem:[%s2 + $0x40] sm:$0xff]
      %v398 = vld [vmem:[%s2 + $0x48] sm:$0xff]
      %v399 = vld [vmem:[%s2 + $0x50] sm:$0xff]
      %v400 = vld [vmem:[%s2 + $0x58] sm:$0xff]
      %v401 = vld [vmem:[%s2 + $0x60] sm:$0xff]
      %v402 = vld [vmem:[%s2 + $0x68] sm:$0xff]
      %v403 = vld [vmem:[%s2 + $0x70] sm:$0xff]
      %v404 = vld [vmem:[%s2 + $0x78] sm:$0xff]
      %406 = vset.pattern.permute.xlu0 0
      %407 = vperm.xlu0 %406, %v389
      %v408 = vpop.permute.xlu0 %407
      %411 = vset.pattern.permute.xlu0 0
      %412 = vperm.xlu0 %411, %v390
      %v413 = vpop.permute.xlu0 %412
      %416 = vset.pattern.permute.xlu0 0
      %417 = vperm.xlu0 %416, %v391
      %v418 = vpop.permute.xlu0 %417
      %421 = vset.pattern.permute.xlu0 0
      %422 = vperm.xlu0 %421, %v392
      %v423 = vpop.permute.xlu0 %422
      %426 = vset.pattern.permute.xlu0 0
      %427 = vperm.xlu0 %426, %v393
      %v428 = vpop.permute.xlu0 %427
      %431 = vset.pattern.permute.xlu0 0
      %432 = vperm.xlu0 %431, %v394
      %v433 = vpop.permute.xlu0 %432
      %436 = vset.pattern.permute.xlu0 0
      %437 = vperm.xlu0 %436, %v395
      %v438 = vpop.permute.xlu0 %437
      %441 = vset.pattern.permute.xlu0 0
      %442 = vperm.xlu0 %441, %v396
      %v443 = vpop.permute.xlu0 %442
      %446 = vset.pattern.permute.xlu0 0
      %447 = vperm.xlu0 %446, %v397
      %v448 = vpop.permute.xlu0 %447
      %451 = vset.pattern.permute.xlu0 0
      %452 = vperm.xlu0 %451, %v398
      %v453 = vpop.permute.xlu0 %452
      %456 = vset.pattern.permute.xlu0 0
      %457 = vperm.xlu0 %456, %v399
      %v458 = vpop.permute.xlu0 %457
      %461 = vset.pattern.permute.xlu0 0
      %462 = vperm.xlu0 %461, %v400
      %v463 = vpop.permute.xlu0 %462
      %466 = vset.pattern.permute.xlu0 0
      %467 = vperm.xlu0 %466, %v401
      %v468 = vpop.permute.xlu0 %467
      %471 = vset.pattern.permute.xlu0 0
      %472 = vperm.xlu0 %471, %v402
      %v473 = vpop.permute.xlu0 %472
      %476 = vset.pattern.permute.xlu0 0
      %477 = vperm.xlu0 %476, %v403
      %v478 = vpop.permute.xlu0 %477
      %481 = vset.pattern.permute.xlu0 0
      %482 = vperm.xlu0 %481, %v404
      %v483 = vpop.permute.xlu0 %482
      %v485 = vmul.f32 %v373, %v408
      %v486 = vmul.f32 %v374, %v413
      %v487 = vmul.f32 %v375, %v418
      %v488 = vmul.f32 %v376, %v423
      %v489 = vmul.f32 %v377, %v428
      %v490 = vmul.f32 %v378, %v433
      %v491 = vmul.f32 %v379, %v438
      %v492 = vmul.f32 %v380, %v443
      %v493 = vmul.f32 %v381, %v448
      %v494 = vmul.f32 %v382, %v453
      %v495 = vmul.f32 %v383, %v458
      %v496 = vmul.f32 %v384, %v463
      %v497 = vmul.f32 %v385, %v468
      %v498 = vmul.f32 %v386, %v473
      %v499 = vmul.f32 %v387, %v478
      %v500 = vmul.f32 %v388, %v483
      %s501 = smul.u32 0, 128
      %s502 = sshra.s32 %s501, 3
      %s503 = sand.u32 %s501, 7
      %s504 = smul.addr %s502, 4
      %s505 = scalar_lea.vmem %s1, %s504
      %v506 = vld [vmem:[%s505] sm:$0xf]
      %v507 = vld [vmem:[%s505 + $0x4] sm:$0xf]
      %v508 = vld [vmem:[%s505 + $0x8] sm:$0xf]
      %v509 = vld [vmem:[%s505 + $0xc] sm:$0xf]
      %v510 = vld [vmem:[%s505 + $0x10] sm:$0xf]
      %v511 = vld [vmem:[%s505 + $0x14] sm:$0xf]
      %v512 = vld [vmem:[%s505 + $0x18] sm:$0xf]
      %v513 = vld [vmem:[%s505 + $0x1c] sm:$0xf]
      %v514 = vld [vmem:[%s505 + $0x20] sm:$0xf]
      %v515 = vld [vmem:[%s505 + $0x24] sm:$0xf]
      %v516 = vld [vmem:[%s505 + $0x28] sm:$0xf]
      %v517 = vld [vmem:[%s505 + $0x2c] sm:$0xf]
      %v518 = vld [vmem:[%s505 + $0x30] sm:$0xf]
      %v519 = vld [vmem:[%s505 + $0x34] sm:$0xf]
      %v520 = vld [vmem:[%s505 + $0x38] sm:$0xf]
      %v521 = vld [vmem:[%s505 + $0x3c] sm:$0xf]
      %v522 = vpack.c.bf16 %v486, %v485
      %v523 = vpack.c.bf16 %v488, %v487
      %v524 = vpack.c.bf16 %v490, %v489
      %v525 = vpack.c.bf16 %v492, %v491
      %v526 = vpack.c.bf16 %v494, %v493
      %v527 = vpack.c.bf16 %v496, %v495
      %v528 = vpack.c.bf16 %v498, %v497
      %v529 = vpack.c.bf16 %v500, %v499
      %v530 = vld [vmem:[#allocation3] sm:$0xf]
      %v531 = vld [vmem:[#allocation3 + $0x4] sm:$0xf]
      %v532 = vld [vmem:[#allocation3 + $0x8] sm:$0xf]
      %v533 = vld [vmem:[#allocation3 + $0xc] sm:$0xf]
      %v534 = vld [vmem:[#allocation3 + $0x10] sm:$0xf]
      %v535 = vld [vmem:[#allocation3 + $0x14] sm:$0xf]
      %v536 = vld [vmem:[#allocation3 + $0x18] sm:$0xf]
      %v537 = vld [vmem:[#allocation3 + $0x1c] sm:$0xf]
      %v538 = vld [vmem:[#allocation3 + $0x20] sm:$0xf]
      %v539 = vld [vmem:[#allocation3 + $0x24] sm:$0xf]
      %v540 = vld [vmem:[#allocation3 + $0x28] sm:$0xf]
      %v541 = vld [vmem:[#allocation3 + $0x2c] sm:$0xf]
      %v542 = vld [vmem:[#allocation3 + $0x30] sm:$0xf]
      %v543 = vld [vmem:[#allocation3 + $0x34] sm:$0xf]
      %v544 = vld [vmem:[#allocation3 + $0x38] sm:$0xf]
      %v545 = vld [vmem:[#allocation3 + $0x3c] sm:$0xf]
      %v546 = vld [vmem:[#allocation6] sm:$0xf]
      %v547 = vld [vmem:[#allocation6 + $0x4] sm:$0xf]
      %v548 = vld [vmem:[#allocation6 + $0x8] sm:$0xf]
      %v549 = vld [vmem:[#allocation6 + $0xc] sm:$0xf]
      %v550 = vld [vmem:[#allocation6 + $0x10] sm:$0xf]
      %v551 = vld [vmem:[#allocation6 + $0x14] sm:$0xf]
      %v552 = vld [vmem:[#allocation6 + $0x18] sm:$0xf]
      %v553 = vld [vmem:[#allocation6 + $0x1c] sm:$0xf]
      %v554 = vld [vmem:[#allocation6 + $0x20] sm:$0xf]
      %v555 = vld [vmem:[#allocation6 + $0x24] sm:$0xf]
      %v556 = vld [vmem:[#allocation6 + $0x28] sm:$0xf]
      %v557 = vld [vmem:[#allocation6 + $0x2c] sm:$0xf]
      %v558 = vld [vmem:[#allocation6 + $0x30] sm:$0xf]
      %v559 = vld [vmem:[#allocation6 + $0x34] sm:$0xf]
      %v560 = vld [vmem:[#allocation6 + $0x38] sm:$0xf]
      %v561 = vld [vmem:[#allocation6 + $0x3c] sm:$0xf]
      %v578 = vunpack.c.l.b16 %v506
      %v579 = vunpack.c.l.b16 %v507
      %v580 = vunpack.c.l.b16 %v508
      %v581 = vunpack.c.l.b16 %v509
      %v582 = vunpack.c.l.b16 %v510
      %v583 = vunpack.c.l.b16 %v511
      %v584 = vunpack.c.l.b16 %v512
      %v585 = vunpack.c.l.b16 %v513
      %v586 = vunpack.c.l.b16 %v514
      %v587 = vunpack.c.l.b16 %v515
      %v588 = vunpack.c.l.b16 %v516
      %v589 = vunpack.c.l.b16 %v517
      %v590 = vunpack.c.l.b16 %v518
      %v591 = vunpack.c.l.b16 %v519
      %v592 = vunpack.c.l.b16 %v520
      %v593 = vunpack.c.l.b16 %v521
      %v594 = vpack.c.b16 %v579, %v578
      %v595 = vpack.c.b16 %v581, %v580
      %v596 = vpack.c.b16 %v583, %v582
      %v597 = vpack.c.b16 %v585, %v584
      %v598 = vpack.c.b16 %v587, %v586
      %v599 = vpack.c.b16 %v589, %v588
      %v600 = vpack.c.b16 %v591, %v590
      %v601 = vpack.c.b16 %v593, %v592
      %v626 = vunpack.c.l.b16 %v546
      %v627 = vunpack.c.l.b16 %v547
      %v628 = vunpack.c.l.b16 %v548
      %v629 = vunpack.c.l.b16 %v549
      %v630 = vunpack.c.l.b16 %v550
      %v631 = vunpack.c.l.b16 %v551
      %v632 = vunpack.c.l.b16 %v552
      %v633 = vunpack.c.l.b16 %v553
      %v634 = vunpack.c.l.b16 %v554
      %v635 = vunpack.c.l.b16 %v555
      %v636 = vunpack.c.l.b16 %v556
      %v637 = vunpack.c.l.b16 %v557
      %v638 = vunpack.c.l.b16 %v558
      %v639 = vunpack.c.l.b16 %v559
      %v640 = vunpack.c.l.b16 %v560
      %v641 = vunpack.c.l.b16 %v561
      %v642 = vpack.c.b16 %v627, %v626
      %v643 = vpack.c.b16 %v629, %v628
      %v644 = vpack.c.b16 %v631, %v630
      %v645 = vpack.c.b16 %v633, %v632
      %v646 = vpack.c.b16 %v635, %v634
      %v647 = vpack.c.b16 %v637, %v636
      %v648 = vpack.c.b16 %v639, %v638
      %v649 = vpack.c.b16 %v641, %v640
      %658 = vmatprep.subr.bf16.mxu0 0
      %659 = vmatpush1.bf16.msra.mxu0 %v642
      %660 = vmatprep.subr.bf16.mxu0 0
      %661 = vmatpush1.bf16.msra.mxu0 %v643
      %662 = vmatprep.subr.bf16.mxu0 0
      %663 = vmatpush1.bf16.msra.mxu0 %v644
      %664 = vmatprep.subr.bf16.mxu0 0
      %665 = vmatpush1.bf16.msra.mxu0 %v645
      %666 = vmatprep.subr.bf16.mxu0 0
      %667 = vmatpush1.bf16.msra.mxu0 %v646
      %668 = vmatprep.subr.bf16.mxu0 0
      %669 = vmatpush1.bf16.msra.mxu0 %v647
      %670 = vmatprep.subr.bf16.mxu0 0
      %671 = vmatpush1.bf16.msra.mxu0 %v648
      %672 = vmatprep.subr.bf16.mxu0 0
      %673 = vmatpush1.bf16.msra.mxu0 %v649
      %674 = vmatprep.subr.bf16.mxu0 0
      %675 = vmatpush1.bf16.msra.mxu0 0
      %676 = vmatprep.subr.bf16.mxu0 0
      %677 = vmatpush1.bf16.msra.mxu0 0
      %678 = vmatprep.subr.bf16.mxu0 0
      %679 = vmatpush1.bf16.msra.mxu0 0
      %680 = vmatprep.subr.bf16.mxu0 0
      %681 = vmatpush1.bf16.msra.mxu0 0
      %682 = vmatprep.subr.bf16.mxu0 0
      %683 = vmatpush1.bf16.msra.mxu0 0
      %684 = vmatprep.subr.bf16.mxu0 0
      %685 = vmatpush1.bf16.msra.mxu0 0
      %686 = vmatprep.subr.bf16.mxu0 0
      %687 = vmatpush1.bf16.msra.mxu0 0
      %688 = vmatprep.subr.bf16.mxu0 0
      %689 = vmatpush1.bf16.msra.mxu0 0
      %690 = vmatprep.mubr.bf16.mxu0 0
      %691 = vmatmul.mubr.bf16.gmra.mrb[0].mxu0 %v594
      %v692 = vpop.f32.mrb[0].mxu0
      %v693 = vadd.f32 0.0, %v692
      %v694 = vpop.f32.mrb[0].mxu0
      %v695 = vpop.f32.mrb[0].mxu0
      %v696 = vadd.f32 0.0, %v695
      %v697 = vpop.f32.mrb[0].mxu0
      %698 = vmatprep.mubr.bf16.mxu0 0
      %699 = vmatmul.mubr.bf16.gmra.mrb[0].mxu0 %v595
      %v700 = vpop.f32.mrb[0].mxu0
      %v701 = vadd.f32 0.0, %v700
      %v702 = vpop.f32.mrb[0].mxu0
      %v703 = vpop.f32.mrb[0].mxu0
      %v704 = vadd.f32 0.0, %v703
      %v705 = vpop.f32.mrb[0].mxu0
      %706 = vmatprep.mubr.bf16.mxu0 0
      %707 = vmatmul.mubr.bf16.gmra.mrb[0].mxu0 %v596
      %v708 = vpop.f32.mrb[0].mxu0
      %v709 = vadd.f32 0.0, %v708
      %v710 = vpop.f32.mrb[0].mxu0
      %v711 = vpop.f32.mrb[0].mxu0
      %v712 = vadd.f32 0.0, %v711
      %v713 = vpop.f32.mrb[0].mxu0
      %714 = vmatprep.mubr.bf16.mxu0 0
      %715 = vmatmul.mubr.bf16.gmra.mrb[0].mxu0 %v597
      %v716 = vpop.f32.mrb[0].mxu0
      %v717 = vadd.f32 0.0, %v716
      %v718 = vpop.f32.mrb[0].mxu0
      %v719 = vpop.f32.mrb[0].mxu0
      %v720 = vadd.f32 0.0, %v719
      %v721 = vpop.f32.mrb[0].mxu0
      %722 = vmatprep.mubr.bf16.mxu0 0
      %723 = vmatmul.mubr.bf16.gmra.mrb[0].mxu0 %v598
      %v724 = vpop.f32.mrb[0].mxu0
      %v725 = vadd.f32 0.0, %v724
      %v726 = vpop.f32.mrb[0].mxu0
      %v727 = vpop.f32.mrb[0].mxu0
      %v728 = vadd.f32 0.0, %v727
      %v729 = vpop.f32.mrb[0].mxu0
      %730 = vmatprep.mubr.bf16.mxu0 0
      %731 = vmatmul.mubr.bf16.gmra.mrb[0].mxu0 %v599
      %v732 = vpop.f32.mrb[0].mxu0
      %v733 = vadd.f32 0.0, %v732
      %v734 = vpop.f32.mrb[0].mxu0
      %v735 = vpop.f32.mrb[0].mxu0
      %v736 = vadd.f32 0.0, %v735
      %v737 = vpop.f32.mrb[0].mxu0
      %738 = vmatprep.mubr.bf16.mxu0 0
      %739 = vmatmul.mubr.bf16.gmra.mrb[0].mxu0 %v600
      %v740 = vpop.f32.mrb[0].mxu0
      %v741 = vadd.f32 0.0, %v740
      %v742 = vpop.f32.mrb[0].mxu0
      %v743 = vpop.f32.mrb[0].mxu0
      %v744 = vadd.f32 0.0, %v743
      %v745 = vpop.f32.mrb[0].mxu0
      %746 = vmatprep.mubr.bf16.mxu0 0
      %747 = vmatmul.mubr.bf16.gmra.mrb[0].mxu0 %v601
      %v748 = vpop.f32.mrb[0].mxu0
      %v749 = vadd.f32 0.0, %v748
      %v750 = vpop.f32.mrb[0].mxu0
      %v751 = vpop.f32.mrb[0].mxu0
      %v752 = vadd.f32 0.0, %v751
      %v753 = vpop.f32.mrb[0].mxu0
      %754 = vdwg.mxu0
      %v771 = vunpack.c.l.b16 %v530
      %v772 = vunpack.c.l.b16 %v531
      %v773 = vunpack.c.l.b16 %v532
      %v774 = vunpack.c.l.b16 %v533
      %v775 = vunpack.c.l.b16 %v534
      %v776 = vunpack.c.l.b16 %v535
      %v777 = vunpack.c.l.b16 %v536
      %v778 = vunpack.c.l.b16 %v537
      %v779 = vunpack.c.l.b16 %v538
      %v780 = vunpack.c.l.b16 %v539
      %v781 = vunpack.c.l.b16 %v540
      %v782 = vunpack.c.l.b16 %v541
      %v783 = vunpack.c.l.b16 %v542
      %v784 = vunpack.c.l.b16 %v543
      %v785 = vunpack.c.l.b16 %v544
      %v786 = vunpack.c.l.b16 %v545
      %v787 = vpack.c.b16 %v772, %v771
      %v788 = vpack.c.b16 %v774, %v773
      %v789 = vpack.c.b16 %v776, %v775
      %v790 = vpack.c.b16 %v778, %v777
      %v791 = vpack.c.b16 %v780, %v779
      %v792 = vpack.c.b16 %v782, %v781
      %v793 = vpack.c.b16 %v784, %v783
      %v794 = vpack.c.b16 %v786, %v785
      %803 = vmatprep.subr.bf16.mxu0 0
      %804 = vmatpush1.bf16.msra.mxu0 %v787
      %805 = vmatprep.subr.bf16.mxu0 0
      %806 = vmatpush1.bf16.msra.mxu0 %v788
      %807 = vmatprep.subr.bf16.mxu0 0
      %808 = vmatpush1.bf16.msra.mxu0 %v789
      %809 = vmatprep.subr.bf16.mxu0 0
      %810 = vmatpush1.bf16.msra.mxu0 %v790
      %811 = vmatprep.subr.bf16.mxu0 0
      %812 = vmatpush1.bf16.msra.mxu0 %v791
      %813 = vmatprep.subr.bf16.mxu0 0
      %814 = vmatpush1.bf16.msra.mxu0 %v792
      %815 = vmatprep.subr.bf16.mxu0 0
      %816 = vmatpush1.bf16.msra.mxu0 %v793
      %817 = vmatprep.subr.bf16.mxu0 0
      %818 = vmatpush1.bf16.msra.mxu0 %v794
      %819 = vmatprep.subr.bf16.mxu0 0
      %820 = vmatpush1.bf16.msra.mxu0 0
      %821 = vmatprep.subr.bf16.mxu0 0
      %822 = vmatpush1.bf16.msra.mxu0 0
      %823 = vmatprep.subr.bf16.mxu0 0
      %824 = vmatpush1.bf16.msra.mxu0 0
      %825 = vmatprep.subr.bf16.mxu0 0
      %826 = vmatpush1.bf16.msra.mxu0 0
      %827 = vmatprep.subr.bf16.mxu0 0
      %828 = vmatpush1.bf16.msra.mxu0 0
      %829 = vmatprep.subr.bf16.mxu0 0
      %830 = vmatpush1.bf16.msra.mxu0 0
      %831 = vmatprep.subr.bf16.mxu0 0
      %832 = vmatpush1.bf16.msra.mxu0 0
      %833 = vmatprep.subr.bf16.mxu0 0
      %834 = vmatpush1.bf16.msra.mxu0 0
      %835 = vmatprep.mubr.bf16.mxu0 0
      %836 = vmatmul.mubr.bf16.gmra.mrb[0].mxu0 %v522
      %v837 = vpop.f32.mrb[0].mxu0
      %v838 = vadd.f32 %v693, %v837
      %v839 = vpop.f32.mrb[0].mxu0
      %v840 = vpop.f32.mrb[0].mxu0
      %v841 = vadd.f32 %v696, %v840
      %v842 = vpop.f32.mrb[0].mxu0
      %843 = vmatprep.mubr.bf16.mxu0 0
      %844 = vmatmul.mubr.bf16.gmra.mrb[0].mxu0 %v523
      %v845 = vpop.f32.mrb[0].mxu0
      %v846 = vadd.f32 %v701, %v845
      %v847 = vpop.f32.mrb[0].mxu0
      %v848 = vpop.f32.mrb[0].mxu0
      %v849 = vadd.f32 %v704, %v848
      %v850 = vpop.f32.mrb[0].mxu0
      %851 = vmatprep.mubr.bf16.mxu0 0
      %852 = vmatmul.mubr.bf16.gmra.mrb[0].mxu0 %v524
      %v853 = vpop.f32.mrb[0].mxu0
      %v854 = vadd.f32 %v709, %v853
      %v855 = vpop.f32.mrb[0].mxu0
      %v856 = vpop.f32.mrb[0].mxu0
      %v857 = vadd.f32 %v712, %v856
      %v858 = vpop.f32.mrb[0].mxu0
      %859 = vmatprep.mubr.bf16.mxu0 0
      %860 = vmatmul.mubr.bf16.gmra.mrb[0].mxu0 %v525
      %v861 = vpop.f32.mrb[0].mxu0
      %v862 = vadd.f32 %v717, %v861
      %v863 = vpop.f32.mrb[0].mxu0
      %v864 = vpop.f32.mrb[0].mxu0
      %v865 = vadd.f32 %v720, %v864
      %v866 = vpop.f32.mrb[0].mxu0
      %867 = vmatprep.mubr.bf16.mxu0 0
      %868 = vmatmul.mubr.bf16.gmra.mrb[0].mxu0 %v526
      %v869 = vpop.f32.mrb[0].mxu0
      %v870 = vadd.f32 %v725, %v869
      %v871 = vpop.f32.mrb[0].mxu0
      %v872 = vpop.f32.mrb[0].mxu0
      %v873 = vadd.f32 %v728, %v872
      %v874 = vpop.f32.mrb[0].mxu0
      %875 = vmatprep.mubr.bf16.mxu0 0
      %876 = vmatmul.mubr.bf16.gmra.mrb[0].mxu0 %v527
      %v877 = vpop.f32.mrb[0].mxu0
      %v878 = vadd.f32 %v733, %v877
      %v879 = vpop.f32.mrb[0].mxu0
      %v880 = vpop.f32.mrb[0].mxu0
      %v881 = vadd.f32 %v736, %v880
      %v882 = vpop.f32.mrb[0].mxu0
      %883 = vmatprep.mubr.bf16.mxu0 0
      %884 = vmatmul.mubr.bf16.gmra.mrb[0].mxu0 %v528
      %v885 = vpop.f32.mrb[0].mxu0
      %v886 = vadd.f32 %v741, %v885
      %v887 = vpop.f32.mrb[0].mxu0
      %v888 = vpop.f32.mrb[0].mxu0
      %v889 = vadd.f32 %v744, %v888
      %v890 = vpop.f32.mrb[0].mxu0
      %891 = vmatprep.mubr.bf16.mxu0 0
      %892 = vmatmul.mubr.bf16.gmra.mrb[0].mxu0 %v529
      %v893 = vpop.f32.mrb[0].mxu0
      %v894 = vadd.f32 %v749, %v893
      %v895 = vpop.f32.mrb[0].mxu0
      %v896 = vpop.f32.mrb[0].mxu0
      %v897 = vadd.f32 %v752, %v896
      %v898 = vpop.f32.mrb[0].mxu0
      %899 = vdwg.mxu0
      %v900 = vld [vmem:[%s5] sm:$0x1]
      %v902 = vlaneseq
      %v903 = vshrl.u32 %v902, 7
      %v904 = vsub.s32 0, %v903
      %v905 = vrot.slane %v900, %v904
      %v907 = vadd.f32 %v838, %v905
      %v908 = vadd.f32 %v841, %v905
      %v909 = vadd.f32 %v846, %v905
      %v910 = vadd.f32 %v849, %v905
      %v911 = vadd.f32 %v854, %v905
      %v912 = vadd.f32 %v857, %v905
      %v913 = vadd.f32 %v862, %v905
      %v914 = vadd.f32 %v865, %v905
      %v915 = vadd.f32 %v870, %v905
      %v916 = vadd.f32 %v873, %v905
      %v917 = vadd.f32 %v878, %v905
      %v918 = vadd.f32 %v881, %v905
      %v919 = vadd.f32 %v886, %v905
      %v920 = vadd.f32 %v889, %v905
      %v921 = vadd.f32 %v894, %v905
      %v922 = vadd.f32 %v897, %v905
      %v923 = vmax.f32 %v907, 0.0
      %v924 = vmax.f32 %v908, 0.0
      %v925 = vmax.f32 %v909, 0.0
      %v926 = vmax.f32 %v910, 0.0
      %v927 = vmax.f32 %v911, 0.0
      %v928 = vmax.f32 %v912, 0.0
      %v929 = vmax.f32 %v913, 0.0
      %v930 = vmax.f32 %v914, 0.0
      %v931 = vmax.f32 %v915, 0.0
      %v932 = vmax.f32 %v916, 0.0
      %v933 = vmax.f32 %v917, 0.0
      %v934 = vmax.f32 %v918, 0.0
      %v935 = vmax.f32 %v919, 0.0
      %v936 = vmax.f32 %v920, 0.0
      %v937 = vmax.f32 %v921, 0.0
      %v938 = vmax.f32 %v922, 0.0
      %v939 = vpack.c.bf16 %v924, %v923
      %v940 = vpack.c.bf16 %v926, %v925
      %v941 = vpack.c.bf16 %v928, %v927
      %v942 = vpack.c.bf16 %v930, %v929
      %v943 = vpack.c.bf16 %v932, %v931
      %v944 = vpack.c.bf16 %v934, %v933
      %v945 = vpack.c.bf16 %v936, %v935
      %v946 = vpack.c.bf16 %v938, %v937
      %v947 = vld [vmem:[#allocation8] sm:$0xf]
      %v948 = vld [vmem:[#allocation8 + $0x4] sm:$0xf]
      %v949 = vld [vmem:[#allocation8 + $0x8] sm:$0xf]
      %v950 = vld [vmem:[#allocation8 + $0xc] sm:$0xf]
      %v951 = vld [vmem:[#allocation8 + $0x10] sm:$0xf]
      %v952 = vld [vmem:[#allocation8 + $0x14] sm:$0xf]
      %v953 = vld [vmem:[#allocation8 + $0x18] sm:$0xf]
      %v954 = vld [vmem:[#allocation8 + $0x1c] sm:$0xf]
      %v955 = vld [vmem:[#allocation8 + $0x20] sm:$0xf]
      %v956 = vld [vmem:[#allocation8 + $0x24] sm:$0xf]
      %v957 = vld [vmem:[#allocation8 + $0x28] sm:$0xf]
      %v958 = vld [vmem:[#allocation8 + $0x2c] sm:$0xf]
      %v959 = vld [vmem:[#allocation8 + $0x30] sm:$0xf]
      %v960 = vld [vmem:[#allocation8 + $0x34] sm:$0xf]
      %v961 = vld [vmem:[#allocation8 + $0x38] sm:$0xf]
      %v962 = vld [vmem:[#allocation8 + $0x3c] sm:$0xf]
      %v963 = vld [vmem:[%s7] sm:$0x1]
      %v965 = vlaneseq
      %v966 = vshrl.u32 %v965, 7
      %v967 = vsub.s32 0, %v966
      %v968 = vrot.slane %v963, %v967
      %v986 = vunpack.c.l.b16 %v947
      %v987 = vunpack.c.l.b16 %v948
      %v988 = vunpack.c.l.b16 %v949
      %v989 = vunpack.c.l.b16 %v950
      %v990 = vunpack.c.l.b16 %v951
      %v991 = vunpack.c.l.b16 %v952
      %v992 = vunpack.c.l.b16 %v953
      %v993 = vunpack.c.l.b16 %v954
      %v994 = vunpack.c.l.b16 %v955
      %v995 = vunpack.c.l.b16 %v956
      %v996 = vunpack.c.l.b16 %v957
      %v997 = vunpack.c.l.b16 %v958
      %v998 = vunpack.c.l.b16 %v959
      %v999 = vunpack.c.l.b16 %v960
      %v1000 = vunpack.c.l.b16 %v961
      %v1001 = vunpack.c.l.b16 %v962
      %v1002 = vpack.c.b16 %v987, %v986
      %v1003 = vpack.c.b16 %v989, %v988
      %v1004 = vpack.c.b16 %v991, %v990
      %v1005 = vpack.c.b16 %v993, %v992
      %v1006 = vpack.c.b16 %v995, %v994
      %v1007 = vpack.c.b16 %v997, %v996
      %v1008 = vpack.c.b16 %v999, %v998
      %v1009 = vpack.c.b16 %v1001, %v1000
      %1018 = vmatprep.subr.bf16.mxu0 0
      %1019 = vmatpush1.bf16.msra.mxu0 %v1002
      %1020 = vmatprep.subr.bf16.mxu0 0
      %1021 = vmatpush1.bf16.msra.mxu0 %v1003
      %1022 = vmatprep.subr.bf16.mxu0 0
      %1023 = vmatpush1.bf16.msra.mxu0 %v1004
      %1024 = vmatprep.subr.bf16.mxu0 0
      %1025 = vmatpush1.bf16.msra.mxu0 %v1005
      %1026 = vmatprep.subr.bf16.mxu0 0
      %1027 = vmatpush1.bf16.msra.mxu0 %v1006
      %1028 = vmatprep.subr.bf16.mxu0 0
      %1029 = vmatpush1.bf16.msra.mxu0 %v1007
      %1030 = vmatprep.subr.bf16.mxu0 0
      %1031 = vmatpush1.bf16.msra.mxu0 %v1008
      %1032 = vmatprep.subr.bf16.mxu0 0
      %1033 = vmatpush1.bf16.msra.mxu0 %v1009
      %1034 = vmatprep.subr.bf16.mxu0 0
      %1035 = vmatpush1.bf16.msra.mxu0 0
      %1036 = vmatprep.subr.bf16.mxu0 0
      %1037 = vmatpush1.bf16.msra.mxu0 0
      %1038 = vmatprep.subr.bf16.mxu0 0
      %1039 = vmatpush1.bf16.msra.mxu0 0
      %1040 = vmatprep.subr.bf16.mxu0 0
      %1041 = vmatpush1.bf16.msra.mxu0 0
      %1042 = vmatprep.subr.bf16.mxu0 0
      %1043 = vmatpush1.bf16.msra.mxu0 0
      %1044 = vmatprep.subr.bf16.mxu0 0
      %1045 = vmatpush1.bf16.msra.mxu0 0
      %1046 = vmatprep.subr.bf16.mxu0 0
      %1047 = vmatpush1.bf16.msra.mxu0 0
      %1048 = vmatprep.subr.bf16.mxu0 0
      %1049 = vmatpush1.bf16.msra.mxu0 0
      %1050 = vmatprep.mubr.bf16.mxu0 0
      %1051 = vmatmul.mubr.bf16.gmra.mrb[0].mxu0 %v939
      %v1052 = vpop.f32.mrb[0].mxu0
      %v1053 = vadd.f32 %v968, %v1052
      %v1054 = vpop.f32.mrb[0].mxu0
      %v1055 = vpop.f32.mrb[0].mxu0
      %v1056 = vadd.f32 %v968, %v1055
      %v1057 = vpop.f32.mrb[0].mxu0
      %1058 = vmatprep.mubr.bf16.mxu0 0
      %1059 = vmatmul.mubr.bf16.gmra.mrb[0].mxu0 %v940
      %v1060 = vpop.f32.mrb[0].mxu0
      %v1061 = vadd.f32 %v968, %v1060
      %v1062 = vpop.f32.mrb[0].mxu0
      %v1063 = vpop.f32.mrb[0].mxu0
      %v1064 = vadd.f32 %v968, %v1063
      %v1065 = vpop.f32.mrb[0].mxu0
      %1066 = vmatprep.mubr.bf16.mxu0 0
      %1067 = vmatmul.mubr.bf16.gmra.mrb[0].mxu0 %v941
      %v1068 = vpop.f32.mrb[0].mxu0
      %v1069 = vadd.f32 %v968, %v1068
      %v1070 = vpop.f32.mrb[0].mxu0
      %v1071 = vpop.f32.mrb[0].mxu0
      %v1072 = vadd.f32 %v968, %v1071
      %v1073 = vpop.f32.mrb[0].mxu0
      %1074 = vmatprep.mubr.bf16.mxu0 0
      %1075 = vmatmul.mubr.bf16.gmra.mrb[0].mxu0 %v942
      %v1076 = vpop.f32.mrb[0].mxu0
      %v1077 = vadd.f32 %v968, %v1076
      %v1078 = vpop.f32.mrb[0].mxu0
      %v1079 = vpop.f32.mrb[0].mxu0
      %v1080 = vadd.f32 %v968, %v1079
      %v1081 = vpop.f32.mrb[0].mxu0
      %1082 = vmatprep.mubr.bf16.mxu0 0
      %1083 = vmatmul.mubr.bf16.gmra.mrb[0].mxu0 %v943
      %v1084 = vpop.f32.mrb[0].mxu0
      %v1085 = vadd.f32 %v968, %v1084
      %v1086 = vpop.f32.mrb[0].mxu0
      %v1087 = vpop.f32.mrb[0].mxu0
      %v1088 = vadd.f32 %v968, %v1087
      %v1089 = vpop.f32.mrb[0].mxu0
      %1090 = vmatprep.mubr.bf16.mxu0 0
      %1091 = vmatmul.mubr.bf16.gmra.mrb[0].mxu0 %v944
      %v1092 = vpop.f32.mrb[0].mxu0
      %v1093 = vadd.f32 %v968, %v1092
      %v1094 = vpop.f32.mrb[0].mxu0
      %v1095 = vpop.f32.mrb[0].mxu0
      %v1096 = vadd.f32 %v968, %v1095
      %v1097 = vpop.f32.mrb[0].mxu0
      %1098 = vmatprep.mubr.bf16.mxu0 0
      %1099 = vmatmul.mubr.bf16.gmra.mrb[0].mxu0 %v945
      %v1100 = vpop.f32.mrb[0].mxu0
      %v1101 = vadd.f32 %v968, %v1100
      %v1102 = vpop.f32.mrb[0].mxu0
      %v1103 = vpop.f32.mrb[0].mxu0
      %v1104 = vadd.f32 %v968, %v1103
      %v1105 = vpop.f32.mrb[0].mxu0
      %1106 = vmatprep.mubr.bf16.mxu0 0
      %1107 = vmatmul.mubr.bf16.gmra.mrb[0].mxu0 %v946
      %v1108 = vpop.f32.mrb[0].mxu0
      %v1109 = vadd.f32 %v968, %v1108
      %v1110 = vpop.f32.mrb[0].mxu0
      %v1111 = vpop.f32.mrb[0].mxu0
      %v1112 = vadd.f32 %v968, %v1111
      %v1113 = vpop.f32.mrb[0].mxu0
      %1114 = vdwg.mxu0
      %1115 = vst [vmem:[#allocation9] sm:$0xff] %v1053
      %1116 = vst [vmem:[#allocation9 + $0x8] sm:$0xff] %v1056
      %1117 = vst [vmem:[#allocation9 + $0x10] sm:$0xff] %v1061
      %1118 = vst [vmem:[#allocation9 + $0x18] sm:$0xff] %v1064
      %1119 = vst [vmem:[#allocation9 + $0x20] sm:$0xff] %v1069
      %1120 = vst [vmem:[#allocation9 + $0x28] sm:$0xff] %v1072
      %1121 = vst [vmem:[#allocation9 + $0x30] sm:$0xff] %v1077
      %1122 = vst [vmem:[#allocation9 + $0x38] sm:$0xff] %v1080
      %1123 = vst [vmem:[#allocation9 + $0x40] sm:$0xff] %v1085
      %1124 = vst [vmem:[#allocation9 + $0x48] sm:$0xff] %v1088
      %1125 = vst [vmem:[#allocation9 + $0x50] sm:$0xff] %v1093
      %1126 = vst [vmem:[#allocation9 + $0x58] sm:$0xff] %v1096
      %1127 = vst [vmem:[#allocation9 + $0x60] sm:$0xff] %v1101
      %1128 = vst [vmem:[#allocation9 + $0x68] sm:$0xff] %v1104
      %1129 = vst [vmem:[#allocation9 + $0x70] sm:$0xff] %v1109
      %1130 = vst [vmem:[#allocation9 + $0x78] sm:$0xff] %v1112
    $region53: #{tpu_custom_call.1} parent=1 // pred_fallthru
      _
    // Predicated region
    $region54: #{tpu_custom_call.1} parent=1 // pred_check
      _
    $region55: #{tpu_custom_call.1} parent=1 // pred_check_branch
      %1132 = sbr.rel (0) target = $region57
    $region56: #{tpu_custom_call.1} parent=1 // pred_region
      %s1134 = ssub.s32 2048, 2048
      %1135 = vsyncadd [#allocation5], %s1134
      %s1136 = sshll.u32 [#allocation9], 4
      %s1137 = int_to_ptr.vmem [resolvable:$true] %s1136
      %1142 = dma.vmem_to_hbm [thread:$0]  %s1137, 2048, %s8, [#allocation5], 128, 128, 8
    $region57: #{tpu_custom_call.1} parent=1 // pred_fallthru
      _
    // Predicated region
    $region58: #{tpu_custom_call.1} parent=1 // pred_check
      _
    $region59: #{tpu_custom_call.1} parent=1 // pred_check_branch
      %1144 = sbr.rel (0) target = $region61
    $region60: #{tpu_custom_call.1} parent=1 // pred_region
      %1145 = dma.done [#allocation5], 2048
    $region61: #{tpu_custom_call.1} parent=1 // pred_fallthru
      _
    %1146 = vsyncpa [#allocation4], 1
    %1147 = vsyncpa [#allocation7], 1
    %1148 = vsyncpa [#allocation5], 1

</llo_original>
